<compile_context>
chip_gen: v5e
topology: v5e:2x2
jax: 0.10.0
libtpu: 0.0.40
codegen_flags: <defaults>
</compile_context>

<pallas_src>
import jax
import jax.numpy as jnp
from jax import lax
from jax.experimental import pallas as pl
from jax.experimental.pallas import tpu as pltpu


# ---------------------------------------------------------------------------
# Fused kernel: folded-embedding gather + batched ReLU-RNN layers + classifier.
# One grid step == one batch block of Bb sequences (grid=(num_blocks,)).
# ---------------------------------------------------------------------------
def _make_fused_kernel(num_upper, T, Bb):
    def kernel(*refs):
        # refs = [ids(SMEM), emb_wih0, whh0, bias0, (wih, whh, bias)*num_upper,
        #         wc_pad, bc_pad, out]
        ids_ref = refs[0]                               # (B, T) int32 in SMEM
        emb_ref = refs[1]                               # (V1, H)  = embedding @ W_ih0^T
        whh0_ref = refs[2]                              # (H, H)
        bias0_ref = refs[3]                             # (1, H)
        upper_refs = refs[4:4 + 3 * num_upper]
        wc_ref = refs[4 + 3 * num_upper]                # (H, 128)
        bc_ref = refs[5 + 3 * num_upper]                # (1, 128)
        o_ref = refs[6 + 3 * num_upper]                 # (1, T*Bb, 128)

        H = whh0_ref.shape[0]
        b0 = pl.program_id(0) * Bb                      # first sequence of this block

        # ---- Layer 0: folded embedding gather IS the hoisted input projection ----
        whh0 = whh0_ref[...]
        bias0 = jnp.broadcast_to(bias0_ref[...], (Bb, H))   # hoisted broadcast
        h = None
        h_list = []
        for t in range(T):
            # Scalar-indexed row gather (ids live in SMEM, rows in VMEM).
            rows = [emb_ref[pl.ds(ids_ref[b0 + b, t], 1), :] for b in range(Bb)]
            pre_t = (rows[0] if Bb == 1 else jnp.concatenate(rows, axis=0)) + bias0
            if t == 0:                                   # h_prev == 0
                h = jnp.maximum(pre_t, 0.0)
            else:
                h = jnp.maximum(
                    pre_t + jnp.dot(h, whh0, preferred_element_type=jnp.float32), 0.0)
            h_list.append(h)
        x = jnp.concatenate(h_list, axis=0) if T > 1 else h_list[0]   # (T*Bb, H), time-major

        # ---- Layers 1..L-1 (nonlinearity='relu', h0 = 0) ----
        for l in range(num_upper):
            wih = upper_refs[3 * l][...]                 # (H, H)
            whh = upper_refs[3 * l + 1][...]             # (H, H)
            bias = upper_refs[3 * l + 2][...]            # (1, H)

            # Hoisted input projection + bias: one batched matmul per layer.
            pre = jnp.dot(x, wih, preferred_element_type=jnp.float32) + bias   # (T*Bb, H)

            h = jnp.maximum(pre[0:Bb, :], 0.0)
            h_list = [h]
            for t in range(1, T):
                h = jnp.maximum(
                    pre[t * Bb:(t + 1) * Bb, :]
                    + jnp.dot(h, whh, preferred_element_type=jnp.float32), 0.0)
                h_list.append(h)
            x = jnp.concatenate(h_list, axis=0) if T > 1 else h_list[0]

        # ---- Classifier epilogue: single dense lane-wide (T*Bb, 128) store ----
        logits = jnp.dot(x, wc_ref[...], preferred_element_type=jnp.float32) + bc_ref[...]
        o_ref[0] = logits

    return kernel


# ---------------------------------------------------------------------------
# Forward wrapper
# ---------------------------------------------------------------------------
def torch_model_forward(x_ids, kp, num_blocks=1):
    """Equivalent of TorchModel.forward(x) (inference path, y=None). Returns (B, T, 2).

    num_blocks=1 on v5e/v6e (single TensorCore); num_blocks=2 on v7x shards the batch
    across both TensorCores (requires B % num_blocks == 0).
    """
    B, T = x_ids.shape
    H = kp["whh0_t"].shape[0]
    num_upper = len(kp["upper_layers"])
    C_PAD = kp["wc_pad"].shape[1]
    assert B % num_blocks == 0
    Bb = B // num_blocks

    def full_spec(shape):
        nd = len(shape)
        return pl.BlockSpec(shape, lambda n, ids, _nd=nd: (0,) * _nd)

    in_specs = [full_spec(kp["emb_wih0"].shape),
                full_spec(kp["whh0_t"].shape),
                full_spec(kp["bias0"].shape)]
    args = [kp["emb_wih0"], kp["whh0_t"], kp["bias0"]]
    for layer in kp["upper_layers"]:
        in_specs += [full_spec(layer["wih_t"].shape),
                     full_spec(layer["whh_t"].shape),
                     full_spec(layer["bias"].shape)]
        args += [layer["wih_t"], layer["whh_t"], layer["bias"]]
    in_specs += [full_spec(kp["wc_pad"].shape), full_spec(kp["bc_pad"].shape)]
    args += [kp["wc_pad"], kp["bc_pad"]]

    logits_pad = pl.pallas_call(
        _make_fused_kernel(num_upper, T, Bb),
        out_shape=jax.ShapeDtypeStruct((num_blocks, T * Bb, C_PAD), jnp.float32),
        grid_spec=pltpu.PrefetchScalarGridSpec(
            num_scalar_prefetch=1,                     # ids -> SMEM
            grid=(num_blocks,),
            in_specs=in_specs,
            out_specs=pl.BlockSpec((1, T * Bb, C_PAD), lambda n, ids: (n, 0, 0)),
        ),
        compiler_params=pltpu.CompilerParams(dimension_semantics=("parallel",)),
    )(x_ids.astype(jnp.int32), *args)

    # Tiny wrapper-side re-layout (time-major blocks -> (B, T, 2)); B*T=16 rows, negligible.
    out = logits_pad.reshape(num_blocks, T, Bb, C_PAD)[:, :, :, :2]
    return jnp.transpose(out, (0, 2, 1, 3)).reshape(B, T, 2)


# ---------------------------------------------------------------------------
# Pure-JAX reference (for correctness check)
# ---------------------------------------------------------------------------
def torch_model_forward_ref(x_ids, params):
    hi = lax.Precision.HIGHEST
    h = params["embedding"][x_ids]                                  # (B, T, D)
    B = h.shape[0]
    for layer in params["rnn_layers"]:
        wih, whh = layer["w_ih"], layer["w_hh"]
        bias = layer["b_ih"] + layer["b_hh"]
        H = whh.shape[0]

        def step(h_prev, x_t):
            h_new = jax.nn.relu(jnp.dot(x_t, wih.T, precision=hi)
                                + jnp.dot(h_prev, whh.T, precision=hi) + bias)
            return h_new, h_new

        h0 = jnp.zeros((B, H), jnp.float32)
        _, hs = lax.scan(step, h0, jnp.transpose(h, (1, 0, 2)))
        h = jnp.transpose(hs, (1, 0, 2))                            # (B, T, H)
    return jnp.dot(h, params["w_classify"].T, precision=hi) + params["b_classify"]


# ---------------------------------------------------------------------------
# Parameter construction (PyTorch-default-style init) + one-time kernel layout prep
# ---------------------------------------------------------------------------
def make_params(key, vocab_size, input_dim, hidden_size, num_rnn_layers):
    keys = jax.random.split(key, 3 + 4 * num_rnn_layers)
    k_emb, k_wc, k_bc = keys[0], keys[1], keys[2]
    layer_keys = keys[3:]

    params = {}
    # nn.Embedding(len(vocab)+1, input_dim): N(0, 1)
    params["embedding"] = jax.random.normal(k_emb, (vocab_size + 1, input_dim), jnp.float32)

    # nn.RNN weights: uniform(-1/sqrt(H), 1/sqrt(H))
    k_rnn = 1.0 / jnp.sqrt(jnp.float32(hidden_size))
    layers = []
    for l in range(num_rnn_layers):
        din = input_dim if l == 0 else hidden_size
        k0, k1, k2, k3 = layer_keys[4 * l: 4 * l + 4]
        layers.append({
            "w_ih": jax.random.uniform(k0, (hidden_size, din), jnp.float32, -k_rnn, k_rnn),
            "w_hh": jax.random.uniform(k1, (hidden_size, hidden_size), jnp.float32, -k_rnn, k_rnn),
            "b_ih": jax.random.uniform(k2, (hidden_size,), jnp.float32, -k_rnn, k_rnn),
            "b_hh": jax.random.uniform(k3, (hidden_size,), jnp.float32, -k_rnn, k_rnn),
        })
    params["rnn_layers"] = layers

    # nn.Linear(hidden_size, 2): uniform(-1/sqrt(H), 1/sqrt(H))
    k_lin = 1.0 / jnp.sqrt(jnp.float32(hidden_size))
    params["w_classify"] = jax.random.uniform(k_wc, (2, hidden_size), jnp.float32, -k_lin, k_lin)
    params["b_classify"] = jax.random.uniform(k_bc, (2,), jnp.float32, -k_lin, k_lin)
    return params


def prepare_kernel_params(params, c_pad=128):
    """One-time layout prep: fold embedding into layer-0 projection, transpose weights,
    combine biases, lane-pad the classifier."""
    hi = lax.Precision.HIGHEST
    layers = params["rnn_layers"]
    H = layers[0]["w_hh"].shape[0]

    wih0_t = jnp.transpose(layers[0]["w_ih"]).astype(jnp.float32)           # (D, H)
    kp = {
        # Exact fold: onehot @ emb @ W_ih0^T == onehot @ (emb @ W_ih0^T).
        "emb_wih0": jnp.dot(params["embedding"].astype(jnp.float32), wih0_t,
                            precision=hi),                                  # (V1, H)
        "whh0_t": jnp.transpose(layers[0]["w_hh"]).astype(jnp.float32),     # (H, H)
        "bias0": (layers[0]["b_ih"] + layers[0]["b_hh"]).reshape(1, H).astype(jnp.float32),
    }
    upper = []
    for layer in layers[1:]:
        upper.append({
            "wih_t": jnp.transpose(layer["w_ih"]).astype(jnp.float32),      # (H, H)
            "whh_t": jnp.transpose(layer["w_hh"]).astype(jnp.float32),      # (H, H)
            "bias": (layer["b_ih"] + layer["b_hh"]).reshape(1, H).astype(jnp.float32),
        })
    kp["upper_layers"] = upper

    n_cls = params["w_classify"].shape[0]
    kp["wc_pad"] = jnp.zeros((H, c_pad), jnp.float32).at[:, :n_cls].set(
        jnp.transpose(params["w_classify"]).astype(jnp.float32))
    kp["bc_pad"] = jnp.zeros((1, c_pad), jnp.float32).at[:, :n_cls].set(
        params["b_classify"].reshape(1, n_cls).astype(jnp.float32))
    return kp


# ---------------------------------------------------------------------------
# Main
# ---------------------------------------------------------------------------
if __name__ == "__main__":
    vocab_size = 20          # len(vocab)
    input_dim = 32
    hidden_size = 32
    num_rnn_layers = 2
    B, T = 2, 8

    key = jax.random.PRNGKey(0)
    k_params, k_x = jax.random.split(key)
    params = make_params(k_params, vocab_size, input_dim, hidden_size, num_rnn_layers)
    kparams = prepare_kernel_params(params)

    x_ids = jax.random.randint(k_x, (B, T), 0, vocab_size + 1, dtype=jnp.int32)

    forward = jax.jit(torch_model_forward)
    y_pred = forward(x_ids, kparams)
    y_pred = jax.block_until_ready(y_pred)

    assert y_pred.shape == (B, T, 2), y_pred.shape
    assert y_pred.dtype == jnp.float32
    assert bool(jnp.all(jnp.isfinite(y_pred)))

    y_ref = torch_model_forward_ref(x_ids, params)
    assert bool(jnp.allclose(y_pred, y_ref, atol=5e-2, rtol=5e-2))

    print("KERNEL_OK")
</pallas_src>

<mosaic_0001>
module attributes {stable_mosaic.version = 11 : i64} {
  func.func @kernel(%arg0: i32, %arg1: memref<2x8xi32, #tpu.memory_space<smem>>, %arg2: memref<21x32xf32, #tpu.memory_space<vmem>>, %arg3: memref<32x32xf32, #tpu.memory_space<vmem>>, %arg4: memref<1x32xf32, #tpu.memory_space<vmem>>, %arg5: memref<32x32xf32, #tpu.memory_space<vmem>>, %arg6: memref<32x32xf32, #tpu.memory_space<vmem>>, %arg7: memref<1x32xf32, #tpu.memory_space<vmem>>, %arg8: memref<32x128xf32, #tpu.memory_space<vmem>>, %arg9: memref<1x128xf32, #tpu.memory_space<vmem>>, %arg10: memref<1x16x128xf32, #tpu.memory_space<vmem>>) attributes {dimension_semantics = [#tpu.dimension_semantics<parallel>], iteration_bounds = array<i64: 1>, scalar_prefetch = 1 : i64, scratch_operands = 0 : i64, tpu.core_type = #tpu.core_type<tc>, window_params = [{pipeline_mode = #tpu.pipeline_mode<synchronous>, transform_indices = @transform_0, window_bounds = array<i64: 21, 32>}, {pipeline_mode = #tpu.pipeline_mode<synchronous>, transform_indices = @transform_1, window_bounds = array<i64: 32, 32>}, {pipeline_mode = #tpu.pipeline_mode<synchronous>, transform_indices = @transform_2, window_bounds = array<i64: 1, 32>}, {pipeline_mode = #tpu.pipeline_mode<synchronous>, transform_indices = @transform_3, window_bounds = array<i64: 32, 32>}, {pipeline_mode = #tpu.pipeline_mode<synchronous>, transform_indices = @transform_4, window_bounds = array<i64: 32, 32>}, {pipeline_mode = #tpu.pipeline_mode<synchronous>, transform_indices = @transform_5, window_bounds = array<i64: 1, 32>}, {pipeline_mode = #tpu.pipeline_mode<synchronous>, transform_indices = @transform_6, window_bounds = array<i64: 32, 128>}, {pipeline_mode = #tpu.pipeline_mode<synchronous>, transform_indices = @transform_7, window_bounds = array<i64: 1, 128>}, {transform_indices = @transform_8, window_bounds = array<i64: 1, 16, 128>}]} {
    %c2_i32 = arith.constant 2 : i32
    %0 = arith.muli %arg0, %c2_i32 : i32
    %c0 = arith.constant 0 : index
    %c0_0 = arith.constant 0 : index
    %1 = vector.load %arg3[%c0, %c0_0] : memref<32x32xf32, #tpu.memory_space<vmem>>, vector<32x32xf32>
    %c0_1 = arith.constant 0 : index
    %c0_2 = arith.constant 0 : index
    %2 = vector.load %arg4[%c0_1, %c0_2] : memref<1x32xf32, #tpu.memory_space<vmem>>, vector<1x32xf32>
    %3 = vector.shape_cast %2 : vector<1x32xf32> to vector<1x32xf32>
    %4 = vector.broadcast %3 : vector<1x32xf32> to vector<2x32xf32>
    %c0_i32 = arith.constant 0 : i32
    %5 = arith.addi %0, %c0_i32 : i32
    %6 = arith.index_cast %5 : i32 to index
    %c0_3 = arith.constant 0 : index
    %7 = memref.load %arg1[%6, %c0_3] : memref<2x8xi32, #tpu.memory_space<smem>>
    %8 = arith.index_cast %7 : i32 to index
    %c0_4 = arith.constant 0 : index
    %9 = vector.load %arg2[%8, %c0_4] : memref<21x32xf32, #tpu.memory_space<vmem>>, vector<1x32xf32>
    %c1_i32 = arith.constant 1 : i32
    %10 = arith.addi %0, %c1_i32 : i32
    %11 = arith.index_cast %10 : i32 to index
    %c0_5 = arith.constant 0 : index
    %12 = memref.load %arg1[%11, %c0_5] : memref<2x8xi32, #tpu.memory_space<smem>>
    %13 = arith.index_cast %12 : i32 to index
    %c0_6 = arith.constant 0 : index
    %14 = vector.load %arg2[%13, %c0_6] : memref<21x32xf32, #tpu.memory_space<vmem>>, vector<1x32xf32>
    %15 = tpu.concatenate %9, %14 in 0 : vector<1x32xf32>, vector<1x32xf32> -> vector<2x32xf32>
    %16 = arith.addf %15, %4 : vector<2x32xf32>
    %cst = arith.constant 0.000000e+00 : f32
    %17 = vector.broadcast %cst : f32 to vector<2x32xf32>
    %18 = arith.maximumf %16, %17 : vector<2x32xf32>
    %c0_i32_7 = arith.constant 0 : i32
    %19 = arith.addi %0, %c0_i32_7 : i32
    %20 = arith.index_cast %19 : i32 to index
    %c1 = arith.constant 1 : index
    %21 = memref.load %arg1[%20, %c1] : memref<2x8xi32, #tpu.memory_space<smem>>
    %22 = arith.index_cast %21 : i32 to index
    %c0_8 = arith.constant 0 : index
    %23 = vector.load %arg2[%22, %c0_8] : memref<21x32xf32, #tpu.memory_space<vmem>>, vector<1x32xf32>
    %c1_i32_9 = arith.constant 1 : i32
    %24 = arith.addi %0, %c1_i32_9 : i32
    %25 = arith.index_cast %24 : i32 to index
    %c1_10 = arith.constant 1 : index
    %26 = memref.load %arg1[%25, %c1_10] : memref<2x8xi32, #tpu.memory_space<smem>>
    %27 = arith.index_cast %26 : i32 to index
    %c0_11 = arith.constant 0 : index
    %28 = vector.load %arg2[%27, %c0_11] : memref<21x32xf32, #tpu.memory_space<vmem>>, vector<1x32xf32>
    %29 = tpu.concatenate %23, %28 in 0 : vector<1x32xf32>, vector<1x32xf32> -> vector<2x32xf32>
    %30 = arith.addf %29, %4 : vector<2x32xf32>
    %cst_12 = arith.constant dense<0.000000e+00> : vector<2x32xf32>
    %31 = tpu.matmul %18, %1, %cst_12 {dimension_numbers = #tpu.dot_dimension_numbers<[1], [0], [0], [1], [0, 0, 1, 1], [], []>} : vector<2x32xf32>, vector<32x32xf32>, vector<2x32xf32> -> vector<2x32xf32>
    %32 = arith.addf %30, %31 : vector<2x32xf32>
    %cst_13 = arith.constant 0.000000e+00 : f32
    %33 = vector.broadcast %cst_13 : f32 to vector<2x32xf32>
    %34 = arith.maximumf %32, %33 : vector<2x32xf32>
    %c0_i32_14 = arith.constant 0 : i32
    %35 = arith.addi %0, %c0_i32_14 : i32
    %36 = arith.index_cast %35 : i32 to index
    %c2 = arith.constant 2 : index
    %37 = memref.load %arg1[%36, %c2] : memref<2x8xi32, #tpu.memory_space<smem>>
    %38 = arith.index_cast %37 : i32 to index
    %c0_15 = arith.constant 0 : index
    %39 = vector.load %arg2[%38, %c0_15] : memref<21x32xf32, #tpu.memory_space<vmem>>, vector<1x32xf32>
    %c1_i32_16 = arith.constant 1 : i32
    %40 = arith.addi %0, %c1_i32_16 : i32
    %41 = arith.index_cast %40 : i32 to index
    %c2_17 = arith.constant 2 : index
    %42 = memref.load %arg1[%41, %c2_17] : memref<2x8xi32, #tpu.memory_space<smem>>
    %43 = arith.index_cast %42 : i32 to index
    %c0_18 = arith.constant 0 : index
    %44 = vector.load %arg2[%43, %c0_18] : memref<21x32xf32, #tpu.memory_space<vmem>>, vector<1x32xf32>
    %45 = tpu.concatenate %39, %44 in 0 : vector<1x32xf32>, vector<1x32xf32> -> vector<2x32xf32>
    %46 = arith.addf %45, %4 : vector<2x32xf32>
    %cst_19 = arith.constant dense<0.000000e+00> : vector<2x32xf32>
    %47 = tpu.matmul %34, %1, %cst_19 {dimension_numbers = #tpu.dot_dimension_numbers<[1], [0], [0], [1], [0, 0, 1, 1], [], []>} : vector<2x32xf32>, vector<32x32xf32>, vector<2x32xf32> -> vector<2x32xf32>
    %48 = arith.addf %46, %47 : vector<2x32xf32>
    %cst_20 = arith.constant 0.000000e+00 : f32
    %49 = vector.broadcast %cst_20 : f32 to vector<2x32xf32>
    %50 = arith.maximumf %48, %49 : vector<2x32xf32>
    %c0_i32_21 = arith.constant 0 : i32
    %51 = arith.addi %0, %c0_i32_21 : i32
    %52 = arith.index_cast %51 : i32 to index
    %c3 = arith.constant 3 : index
    %53 = memref.load %arg1[%52, %c3] : memref<2x8xi32, #tpu.memory_space<smem>>
    %54 = arith.index_cast %53 : i32 to index
    %c0_22 = arith.constant 0 : index
    %55 = vector.load %arg2[%54, %c0_22] : memref<21x32xf32, #tpu.memory_space<vmem>>, vector<1x32xf32>
    %c1_i32_23 = arith.constant 1 : i32
    %56 = arith.addi %0, %c1_i32_23 : i32
    %57 = arith.index_cast %56 : i32 to index
    %c3_24 = arith.constant 3 : index
    %58 = memref.load %arg1[%57, %c3_24] : memref<2x8xi32, #tpu.memory_space<smem>>
    %59 = arith.index_cast %58 : i32 to index
    %c0_25 = arith.constant 0 : index
    %60 = vector.load %arg2[%59, %c0_25] : memref<21x32xf32, #tpu.memory_space<vmem>>, vector<1x32xf32>
    %61 = tpu.concatenate %55, %60 in 0 : vector<1x32xf32>, vector<1x32xf32> -> vector<2x32xf32>
    %62 = arith.addf %61, %4 : vector<2x32xf32>
    %cst_26 = arith.constant dense<0.000000e+00> : vector<2x32xf32>
    %63 = tpu.matmul %50, %1, %cst_26 {dimension_numbers = #tpu.dot_dimension_numbers<[1], [0], [0], [1], [0, 0, 1, 1], [], []>} : vector<2x32xf32>, vector<32x32xf32>, vector<2x32xf32> -> vector<2x32xf32>
    %64 = arith.addf %62, %63 : vector<2x32xf32>
    %cst_27 = arith.constant 0.000000e+00 : f32
    %65 = vector.broadcast %cst_27 : f32 to vector<2x32xf32>
    %66 = arith.maximumf %64, %65 : vector<2x32xf32>
    %c0_i32_28 = arith.constant 0 : i32
    %67 = arith.addi %0, %c0_i32_28 : i32
    %68 = arith.index_cast %67 : i32 to index
    %c4 = arith.constant 4 : index
    %69 = memref.load %arg1[%68, %c4] : memref<2x8xi32, #tpu.memory_space<smem>>
    %70 = arith.index_cast %69 : i32 to index
    %c0_29 = arith.constant 0 : index
    %71 = vector.load %arg2[%70, %c0_29] : memref<21x32xf32, #tpu.memory_space<vmem>>, vector<1x32xf32>
    %c1_i32_30 = arith.constant 1 : i32
    %72 = arith.addi %0, %c1_i32_30 : i32
    %73 = arith.index_cast %72 : i32 to index
    %c4_31 = arith.constant 4 : index
    %74 = memref.load %arg1[%73, %c4_31] : memref<2x8xi32, #tpu.memory_space<smem>>
    %75 = arith.index_cast %74 : i32 to index
    %c0_32 = arith.constant 0 : index
    %76 = vector.load %arg2[%75, %c0_32] : memref<21x32xf32, #tpu.memory_space<vmem>>, vector<1x32xf32>
    %77 = tpu.concatenate %71, %76 in 0 : vector<1x32xf32>, vector<1x32xf32> -> vector<2x32xf32>
    %78 = arith.addf %77, %4 : vector<2x32xf32>
    %cst_33 = arith.constant dense<0.000000e+00> : vector<2x32xf32>
    %79 = tpu.matmul %66, %1, %cst_33 {dimension_numbers = #tpu.dot_dimension_numbers<[1], [0], [0], [1], [0, 0, 1, 1], [], []>} : vector<2x32xf32>, vector<32x32xf32>, vector<2x32xf32> -> vector<2x32xf32>
    %80 = arith.addf %78, %79 : vector<2x32xf32>
    %cst_34 = arith.constant 0.000000e+00 : f32
    %81 = vector.broadcast %cst_34 : f32 to vector<2x32xf32>
    %82 = arith.maximumf %80, %81 : vector<2x32xf32>
    %c0_i32_35 = arith.constant 0 : i32
    %83 = arith.addi %0, %c0_i32_35 : i32
    %84 = arith.index_cast %83 : i32 to index
    %c5 = arith.constant 5 : index
    %85 = memref.load %arg1[%84, %c5] : memref<2x8xi32, #tpu.memory_space<smem>>
    %86 = arith.index_cast %85 : i32 to index
    %c0_36 = arith.constant 0 : index
    %87 = vector.load %arg2[%86, %c0_36] : memref<21x32xf32, #tpu.memory_space<vmem>>, vector<1x32xf32>
    %c1_i32_37 = arith.constant 1 : i32
    %88 = arith.addi %0, %c1_i32_37 : i32
    %89 = arith.index_cast %88 : i32 to index
    %c5_38 = arith.constant 5 : index
    %90 = memref.load %arg1[%89, %c5_38] : memref<2x8xi32, #tpu.memory_space<smem>>
    %91 = arith.index_cast %90 : i32 to index
    %c0_39 = arith.constant 0 : index
    %92 = vector.load %arg2[%91, %c0_39] : memref<21x32xf32, #tpu.memory_space<vmem>>, vector<1x32xf32>
    %93 = tpu.concatenate %87, %92 in 0 : vector<1x32xf32>, vector<1x32xf32> -> vector<2x32xf32>
    %94 = arith.addf %93, %4 : vector<2x32xf32>
    %cst_40 = arith.constant dense<0.000000e+00> : vector<2x32xf32>
    %95 = tpu.matmul %82, %1, %cst_40 {dimension_numbers = #tpu.dot_dimension_numbers<[1], [0], [0], [1], [0, 0, 1, 1], [], []>} : vector<2x32xf32>, vector<32x32xf32>, vector<2x32xf32> -> vector<2x32xf32>
    %96 = arith.addf %94, %95 : vector<2x32xf32>
    %cst_41 = arith.constant 0.000000e+00 : f32
    %97 = vector.broadcast %cst_41 : f32 to vector<2x32xf32>
    %98 = arith.maximumf %96, %97 : vector<2x32xf32>
    %c0_i32_42 = arith.constant 0 : i32
    %99 = arith.addi %0, %c0_i32_42 : i32
    %100 = arith.index_cast %99 : i32 to index
    %c6 = arith.constant 6 : index
    %101 = memref.load %arg1[%100, %c6] : memref<2x8xi32, #tpu.memory_space<smem>>
    %102 = arith.index_cast %101 : i32 to index
    %c0_43 = arith.constant 0 : index
    %103 = vector.load %arg2[%102, %c0_43] : memref<21x32xf32, #tpu.memory_space<vmem>>, vector<1x32xf32>
    %c1_i32_44 = arith.constant 1 : i32
    %104 = arith.addi %0, %c1_i32_44 : i32
    %105 = arith.index_cast %104 : i32 to index
    %c6_45 = arith.constant 6 : index
    %106 = memref.load %arg1[%105, %c6_45] : memref<2x8xi32, #tpu.memory_space<smem>>
    %107 = arith.index_cast %106 : i32 to index
    %c0_46 = arith.constant 0 : index
    %108 = vector.load %arg2[%107, %c0_46] : memref<21x32xf32, #tpu.memory_space<vmem>>, vector<1x32xf32>
    %109 = tpu.concatenate %103, %108 in 0 : vector<1x32xf32>, vector<1x32xf32> -> vector<2x32xf32>
    %110 = arith.addf %109, %4 : vector<2x32xf32>
    %cst_47 = arith.constant dense<0.000000e+00> : vector<2x32xf32>
    %111 = tpu.matmul %98, %1, %cst_47 {dimension_numbers = #tpu.dot_dimension_numbers<[1], [0], [0], [1], [0, 0, 1, 1], [], []>} : vector<2x32xf32>, vector<32x32xf32>, vector<2x32xf32> -> vector<2x32xf32>
    %112 = arith.addf %110, %111 : vector<2x32xf32>
    %cst_48 = arith.constant 0.000000e+00 : f32
    %113 = vector.broadcast %cst_48 : f32 to vector<2x32xf32>
    %114 = arith.maximumf %112, %113 : vector<2x32xf32>
    %c0_i32_49 = arith.constant 0 : i32
    %115 = arith.addi %0, %c0_i32_49 : i32
    %116 = arith.index_cast %115 : i32 to index
    %c7 = arith.constant 7 : index
    %117 = memref.load %arg1[%116, %c7] : memref<2x8xi32, #tpu.memory_space<smem>>
    %118 = arith.index_cast %117 : i32 to index
    %c0_50 = arith.constant 0 : index
    %119 = vector.load %arg2[%118, %c0_50] : memref<21x32xf32, #tpu.memory_space<vmem>>, vector<1x32xf32>
    %c1_i32_51 = arith.constant 1 : i32
    %120 = arith.addi %0, %c1_i32_51 : i32
    %121 = arith.index_cast %120 : i32 to index
    %c7_52 = arith.constant 7 : index
    %122 = memref.load %arg1[%121, %c7_52] : memref<2x8xi32, #tpu.memory_space<smem>>
    %123 = arith.index_cast %122 : i32 to index
    %c0_53 = arith.constant 0 : index
    %124 = vector.load %arg2[%123, %c0_53] : memref<21x32xf32, #tpu.memory_space<vmem>>, vector<1x32xf32>
    %125 = tpu.concatenate %119, %124 in 0 : vector<1x32xf32>, vector<1x32xf32> -> vector<2x32xf32>
    %126 = arith.addf %125, %4 : vector<2x32xf32>
    %cst_54 = arith.constant dense<0.000000e+00> : vector<2x32xf32>
    %127 = tpu.matmul %114, %1, %cst_54 {dimension_numbers = #tpu.dot_dimension_numbers<[1], [0], [0], [1], [0, 0, 1, 1], [], []>} : vector<2x32xf32>, vector<32x32xf32>, vector<2x32xf32> -> vector<2x32xf32>
    %128 = arith.addf %126, %127 : vector<2x32xf32>
    %cst_55 = arith.constant 0.000000e+00 : f32
    %129 = vector.broadcast %cst_55 : f32 to vector<2x32xf32>
    %130 = arith.maximumf %128, %129 : vector<2x32xf32>
    %131 = tpu.concatenate %18, %34, %50, %66, %82, %98, %114, %130 in 0 : vector<2x32xf32>, vector<2x32xf32>, vector<2x32xf32>, vector<2x32xf32>, vector<2x32xf32>, vector<2x32xf32>, vector<2x32xf32>, vector<2x32xf32> -> vector<16x32xf32>
    %c0_56 = arith.constant 0 : index
    %c0_57 = arith.constant 0 : index
    %132 = vector.load %arg5[%c0_56, %c0_57] : memref<32x32xf32, #tpu.memory_space<vmem>>, vector<32x32xf32>
    %c0_58 = arith.constant 0 : index
    %c0_59 = arith.constant 0 : index
    %133 = vector.load %arg6[%c0_58, %c0_59] : memref<32x32xf32, #tpu.memory_space<vmem>>, vector<32x32xf32>
    %c0_60 = arith.constant 0 : index
    %c0_61 = arith.constant 0 : index
    %134 = vector.load %arg7[%c0_60, %c0_61] : memref<1x32xf32, #tpu.memory_space<vmem>>, vector<1x32xf32>
    %cst_62 = arith.constant dense<0.000000e+00> : vector<16x32xf32>
    %135 = tpu.matmul %131, %132, %cst_62 {dimension_numbers = #tpu.dot_dimension_numbers<[1], [0], [0], [1], [0, 0, 1, 1], [], []>} : vector<16x32xf32>, vector<32x32xf32>, vector<16x32xf32> -> vector<16x32xf32>
    %136 = vector.broadcast %134 : vector<1x32xf32> to vector<16x32xf32>
    %137 = arith.addf %135, %136 : vector<16x32xf32>
    %138 = vector.extract_strided_slice %137 {offsets = [0, 0], sizes = [2, 32], strides = [1, 1]} : vector<16x32xf32> to vector<2x32xf32>
    %cst_63 = arith.constant 0.000000e+00 : f32
    %139 = vector.broadcast %cst_63 : f32 to vector<2x32xf32>
    %140 = arith.maximumf %138, %139 : vector<2x32xf32>
    %141 = vector.extract_strided_slice %137 {offsets = [2, 0], sizes = [2, 32], strides = [1, 1]} : vector<16x32xf32> to vector<2x32xf32>
    %cst_64 = arith.constant dense<0.000000e+00> : vector<2x32xf32>
    %142 = tpu.matmul %140, %133, %cst_64 {dimension_numbers = #tpu.dot_dimension_numbers<[1], [0], [0], [1], [0, 0, 1, 1], [], []>} : vector<2x32xf32>, vector<32x32xf32>, vector<2x32xf32> -> vector<2x32xf32>
    %143 = arith.addf %141, %142 : vector<2x32xf32>
    %cst_65 = arith.constant 0.000000e+00 : f32
    %144 = vector.broadcast %cst_65 : f32 to vector<2x32xf32>
    %145 = arith.maximumf %143, %144 : vector<2x32xf32>
    %146 = vector.extract_strided_slice %137 {offsets = [4, 0], sizes = [2, 32], strides = [1, 1]} : vector<16x32xf32> to vector<2x32xf32>
    %cst_66 = arith.constant dense<0.000000e+00> : vector<2x32xf32>
    %147 = tpu.matmul %145, %133, %cst_66 {dimension_numbers = #tpu.dot_dimension_numbers<[1], [0], [0], [1], [0, 0, 1, 1], [], []>} : vector<2x32xf32>, vector<32x32xf32>, vector<2x32xf32> -> vector<2x32xf32>
    %148 = arith.addf %146, %147 : vector<2x32xf32>
    %cst_67 = arith.constant 0.000000e+00 : f32
    %149 = vector.broadcast %cst_67 : f32 to vector<2x32xf32>
    %150 = arith.maximumf %148, %149 : vector<2x32xf32>
    %151 = vector.extract_strided_slice %137 {offsets = [6, 0], sizes = [2, 32], strides = [1, 1]} : vector<16x32xf32> to vector<2x32xf32>
    %cst_68 = arith.constant dense<0.000000e+00> : vector<2x32xf32>
    %152 = tpu.matmul %150, %133, %cst_68 {dimension_numbers = #tpu.dot_dimension_numbers<[1], [0], [0], [1], [0, 0, 1, 1], [], []>} : vector<2x32xf32>, vector<32x32xf32>, vector<2x32xf32> -> vector<2x32xf32>
    %153 = arith.addf %151, %152 : vector<2x32xf32>
    %cst_69 = arith.constant 0.000000e+00 : f32
    %154 = vector.broadcast %cst_69 : f32 to vector<2x32xf32>
    %155 = arith.maximumf %153, %154 : vector<2x32xf32>
    %156 = vector.extract_strided_slice %137 {offsets = [8, 0], sizes = [2, 32], strides = [1, 1]} : vector<16x32xf32> to vector<2x32xf32>
    %cst_70 = arith.constant dense<0.000000e+00> : vector<2x32xf32>
    %157 = tpu.matmul %155, %133, %cst_70 {dimension_numbers = #tpu.dot_dimension_numbers<[1], [0], [0], [1], [0, 0, 1, 1], [], []>} : vector<2x32xf32>, vector<32x32xf32>, vector<2x32xf32> -> vector<2x32xf32>
    %158 = arith.addf %156, %157 : vector<2x32xf32>
    %cst_71 = arith.constant 0.000000e+00 : f32
    %159 = vector.broadcast %cst_71 : f32 to vector<2x32xf32>
    %160 = arith.maximumf %158, %159 : vector<2x32xf32>
    %161 = vector.extract_strided_slice %137 {offsets = [10, 0], sizes = [2, 32], strides = [1, 1]} : vector<16x32xf32> to vector<2x32xf32>
    %cst_72 = arith.constant dense<0.000000e+00> : vector<2x32xf32>
    %162 = tpu.matmul %160, %133, %cst_72 {dimension_numbers = #tpu.dot_dimension_numbers<[1], [0], [0], [1], [0, 0, 1, 1], [], []>} : vector<2x32xf32>, vector<32x32xf32>, vector<2x32xf32> -> vector<2x32xf32>
    %163 = arith.addf %161, %162 : vector<2x32xf32>
    %cst_73 = arith.constant 0.000000e+00 : f32
    %164 = vector.broadcast %cst_73 : f32 to vector<2x32xf32>
    %165 = arith.maximumf %163, %164 : vector<2x32xf32>
    %166 = vector.extract_strided_slice %137 {offsets = [12, 0], sizes = [2, 32], strides = [1, 1]} : vector<16x32xf32> to vector<2x32xf32>
    %cst_74 = arith.constant dense<0.000000e+00> : vector<2x32xf32>
    %167 = tpu.matmul %165, %133, %cst_74 {dimension_numbers = #tpu.dot_dimension_numbers<[1], [0], [0], [1], [0, 0, 1, 1], [], []>} : vector<2x32xf32>, vector<32x32xf32>, vector<2x32xf32> -> vector<2x32xf32>
    %168 = arith.addf %166, %167 : vector<2x32xf32>
    %cst_75 = arith.constant 0.000000e+00 : f32
    %169 = vector.broadcast %cst_75 : f32 to vector<2x32xf32>
    %170 = arith.maximumf %168, %169 : vector<2x32xf32>
    %171 = vector.extract_strided_slice %137 {offsets = [14, 0], sizes = [2, 32], strides = [1, 1]} : vector<16x32xf32> to vector<2x32xf32>
    %cst_76 = arith.constant dense<0.000000e+00> : vector<2x32xf32>
    %172 = tpu.matmul %170, %133, %cst_76 {dimension_numbers = #tpu.dot_dimension_numbers<[1], [0], [0], [1], [0, 0, 1, 1], [], []>} : vector<2x32xf32>, vector<32x32xf32>, vector<2x32xf32> -> vector<2x32xf32>
    %173 = arith.addf %171, %172 : vector<2x32xf32>
    %cst_77 = arith.constant 0.000000e+00 : f32
    %174 = vector.broadcast %cst_77 : f32 to vector<2x32xf32>
    %175 = arith.maximumf %173, %174 : vector<2x32xf32>
    %176 = tpu.concatenate %140, %145, %150, %155, %160, %165, %170, %175 in 0 : vector<2x32xf32>, vector<2x32xf32>, vector<2x32xf32>, vector<2x32xf32>, vector<2x32xf32>, vector<2x32xf32>, vector<2x32xf32>, vector<2x32xf32> -> vector<16x32xf32>
    %c0_78 = arith.constant 0 : index
    %c0_79 = arith.constant 0 : index
    %177 = vector.load %arg8[%c0_78, %c0_79] : memref<32x128xf32, #tpu.memory_space<vmem>>, vector<32x128xf32>
    %cst_80 = arith.constant dense<0.000000e+00> : vector<16x128xf32>
    %178 = tpu.matmul %176, %177, %cst_80 {dimension_numbers = #tpu.dot_dimension_numbers<[1], [0], [0], [1], [0, 0, 1, 1], [], []>} : vector<16x32xf32>, vector<32x128xf32>, vector<16x128xf32> -> vector<16x128xf32>
    %c0_81 = arith.constant 0 : index
    %c0_82 = arith.constant 0 : index
    %179 = vector.load %arg9[%c0_81, %c0_82] : memref<1x128xf32, #tpu.memory_space<vmem>>, vector<1x128xf32>
    %180 = vector.broadcast %179 : vector<1x128xf32> to vector<16x128xf32>
    %181 = arith.addf %178, %180 : vector<16x128xf32>
    %c0_83 = arith.constant 0 : index
    %c0_84 = arith.constant 0 : index
    %c0_85 = arith.constant 0 : index
    %182 = vector.load %arg10[%c0_83, %c0_84, %c0_85] : memref<1x16x128xf32, #tpu.memory_space<vmem>>, vector<1x16x128xf32>
    %183 = vector.shape_cast %182 : vector<1x16x128xf32> to vector<16x128xf32>
    %184 = vector.shape_cast %181 : vector<16x128xf32> to vector<1x16x128xf32>
    tpu.vector_store %arg10[%c0_83, %c0_84, %c0_85], %184 {strides = array<i32>} : memref<1x16x128xf32, #tpu.memory_space<vmem>>, vector<1x16x128xf32>,
    return
  }
  func.func @transform_0(%arg0: i32, %arg1: memref<2x8xi32, #tpu.memory_space<smem>>) -> (i32, i32) {
    %c0_i32 = arith.constant 0 : i32
    %c0_i32_0 = arith.constant 0 : i32
    %c0_i32_1 = arith.constant 0 : i32
    return %c0_i32, %c0_i32_0 : i32, i32
  }
  func.func @transform_1(%arg0: i32, %arg1: memref<2x8xi32, #tpu.memory_space<smem>>) -> (i32, i32) {
    %c0_i32 = arith.constant 0 : i32
    %c0_i32_0 = arith.constant 0 : i32
    %c0_i32_1 = arith.constant 0 : i32
    return %c0_i32, %c0_i32_0 : i32, i32
  }
  func.func @transform_2(%arg0: i32, %arg1: memref<2x8xi32, #tpu.memory_space<smem>>) -> (i32, i32) {
    %c0_i32 = arith.constant 0 : i32
    %c0_i32_0 = arith.constant 0 : i32
    %c0_i32_1 = arith.constant 0 : i32
    return %c0_i32, %c0_i32_0 : i32, i32
  }
  func.func @transform_3(%arg0: i32, %arg1: memref<2x8xi32, #tpu.memory_space<smem>>) -> (i32, i32) {
    %c0_i32 = arith.constant 0 : i32
    %c0_i32_0 = arith.constant 0 : i32
    %c0_i32_1 = arith.constant 0 : i32
    return %c0_i32, %c0_i32_0 : i32, i32
  }
  func.func @transform_4(%arg0: i32, %arg1: memref<2x8xi32, #tpu.memory_space<smem>>) -> (i32, i32) {
    %c0_i32 = arith.constant 0 : i32
    %c0_i32_0 = arith.constant 0 : i32
    %c0_i32_1 = arith.constant 0 : i32
    return %c0_i32, %c0_i32_0 : i32, i32
  }
  func.func @transform_5(%arg0: i32, %arg1: memref<2x8xi32, #tpu.memory_space<smem>>) -> (i32, i32) {
    %c0_i32 = arith.constant 0 : i32
    %c0_i32_0 = arith.constant 0 : i32
    %c0_i32_1 = arith.constant 0 : i32
    return %c0_i32, %c0_i32_0 : i32, i32
  }
  func.func @transform_6(%arg0: i32, %arg1: memref<2x8xi32, #tpu.memory_space<smem>>) -> (i32, i32) {
    %c0_i32 = arith.constant 0 : i32
    %c0_i32_0 = arith.constant 0 : i32
    %c0_i32_1 = arith.constant 0 : i32
    return %c0_i32, %c0_i32_0 : i32, i32
  }
  func.func @transform_7(%arg0: i32, %arg1: memref<2x8xi32, #tpu.memory_space<smem>>) -> (i32, i32) {
    %c0_i32 = arith.constant 0 : i32
    %c0_i32_0 = arith.constant 0 : i32
    %c0_i32_1 = arith.constant 0 : i32
    return %c0_i32, %c0_i32_0 : i32, i32
  }
  func.func @transform_8(%arg0: i32, %arg1: memref<2x8xi32, #tpu.memory_space<smem>>) -> (i32, i32, i32) {
    %c0_i32 = arith.constant 0 : i32
    %c0_i32_0 = arith.constant 0 : i32
    %c0_i32_1 = arith.constant 0 : i32
    return %arg0, %c0_i32, %c0_i32_0 : i32, i32, i32
  }
}

</mosaic_0001>

<llo_original>
// kernel: torch_model_forward.1
$region0: #{torch_model_forward.1}
  #allocation0 [shape = 'u32[]', space=smem, size = 0x4, offset = 0x4, fixed_abs, tag = 'smem constant byte address 0x4 - core index']
  #allocation1 [shape = 'u32[72,128]{1,0:T(1,128)}', space=vmem, size = 0x9000, scoped, tag = 'internal scratch']
  #allocation2 [shape = 's32[1]{0}', space=sflag, size = 0x4, scoped, tag = 'scoped memory for torch_model_forward.1']
  #allocation3 [shape = 'u8[1024]{0}', space=smem, size = 0x400, scoped, tag = 'prefetched SMEM operand 0']
  %s0 = inlined_call_operand.hbm [shape: s32[2,8], index: 0, kind: input, shape index: {}]
  %s1 = inlined_call_operand.hbm [shape: f32[21,32], index: 1, kind: input, shape index: {}]
  %s2 = inlined_call_operand.hbm [shape: f32[32,32], index: 2, kind: input, shape index: {}]
  %s3 = inlined_call_operand.vmem [shape: f32[1,32], index: 3, kind: input, shape index: {}]
  %s4 = inlined_call_operand.hbm [shape: f32[32,32], index: 4, kind: input, shape index: {}]
  %s5 = inlined_call_operand.hbm [shape: f32[32,32], index: 5, kind: input, shape index: {}]
  %s6 = inlined_call_operand.vmem [shape: f32[1,32], index: 6, kind: input, shape index: {}]
  %s7 = inlined_call_operand.hbm [shape: f32[32,128], index: 7, kind: input, shape index: {}]
  %s8 = inlined_call_operand.hbm [shape: f32[1,128], index: 8, kind: input, shape index: {}]
  %s9 = inlined_call_operand.vmem [shape: f32[1,16,128], index: 9, kind: output, shape index: {}]
  %s10 = sld [smem:[#allocation0]]
  $region66: #{torch_model_forward.1} parent=0
    _
  %s12 = ssub.s32 1, %s10
  %s13 = scalar_select 0, %s12, %s10
  %s15 = sshll.u32 %s0, 4
  %s16 = int_to_ptr.hbm [resolvable:$true] %s15
  %18 = dma.hbm_to_smem %s16, 32, [#allocation3], [#allocation2]
  %20 = dma.done [#allocation2], 32
  %21 = sfence
  $region1: #{torch_model_forward.1} parent=0
    #allocation4 [shape = 'u8[12288]{0}', space=vmem, size = 0x3000, scoped, tag = 'input window, operand 1, single buffered']
    #allocation5 [shape = 's32[1]{0}', space=sflag, size = 0x4, scoped, tag = 'scoped memory for torch_model_forward.1']
    #allocation6 [shape = 'u8[16384]{0}', space=vmem, size = 0x4000, scoped, tag = 'input window, operand 2, single buffered']
    #allocation7 [shape = 's32[1]{0}', space=sflag, size = 0x4, scoped, tag = 'scoped memory for torch_model_forward.1']
    #allocation8 [shape = 'u8[16384]{0}', space=vmem, size = 0x4000, scoped, tag = 'input window, operand 4, single buffered']
    #allocation9 [shape = 'u8[16384]{0}', space=vmem, size = 0x4000, scoped, tag = 'input window, operand 5, single buffered']
    #allocation10 [shape = 's32[1]{0}', space=sflag, size = 0x4, scoped, tag = 'scoped memory for torch_model_forward.1']
    #allocation11 [shape = 'u8[16384]{0}', space=vmem, size = 0x4000, scoped, tag = 'input window, operand 7, single buffered']
    #allocation12 [shape = 'u8[512]{0}', space=vmem, size = 0x400, scoped, tag = 'input window, operand 8, single buffered']
    #allocation13 [shape = 's32[1]{0}', space=sflag, size = 0x4, scoped, tag = 'scoped memory for torch_model_forward.1']
    %22 = vsyncpa [#allocation5], 0
    %23 = vsyncpa [#allocation7], 0
    %24 = vsyncpa [#allocation10], 0
    %25 = vsyncpa [#allocation13], 0
    // Predicated region
    $region2: #{torch_model_forward.1} parent=1 // pred_check
      _
    $region3: #{torch_model_forward.1} parent=1 // pred_check_branch
      %27 = sbr.rel (0) target = $region5
    $region4: #{torch_model_forward.1} parent=1 // pred_region
      %29 = vsyncadd [#allocation5], 0
      %s30 = sshll.u32 %s1, 4
      %s31 = int_to_ptr.hbm [resolvable:$true] %s30
      %s32 = sshll.u32 [#allocation4], 4
      %s33 = int_to_ptr.vmem [resolvable:$true] %s32
      %38 = dma.hbm_to_vmem [thread:$0]  %s31, 384, %s33, [#allocation5], 128, 128, 8
    $region5: #{torch_model_forward.1} parent=1 // pred_fallthru
      _
    // Predicated region
    $region6: #{torch_model_forward.1} parent=1 // pred_check
      _
    $region7: #{torch_model_forward.1} parent=1 // pred_check_branch
      %40 = sbr.rel (0) target = $region9
    $region8: #{torch_model_forward.1} parent=1 // pred_region
      %42 = vsyncadd [#allocation7], 0
      %s43 = sshll.u32 %s2, 4
      %s44 = int_to_ptr.hbm [resolvable:$true] %s43
      %s45 = sshll.u32 [#allocation6], 4
      %s46 = int_to_ptr.vmem [resolvable:$true] %s45
      %51 = dma.hbm_to_vmem [thread:$0]  %s44, 512, %s46, [#allocation7], 128, 128, 8
    $region9: #{torch_model_forward.1} parent=1 // pred_fallthru
      _
    // Predicated region
    $region10: #{torch_model_forward.1} parent=1 // pred_check
      _
    $region11: #{torch_model_forward.1} parent=1 // pred_check_branch
      %53 = sbr.rel (0) target = $region13
    $region12: #{torch_model_forward.1} parent=1 // pred_region
      _
    $region13: #{torch_model_forward.1} parent=1 // pred_fallthru
      _
    // Predicated region
    $region14: #{torch_model_forward.1} parent=1 // pred_check
      _
    $region15: #{torch_model_forward.1} parent=1 // pred_check_branch
      %55 = sbr.rel (0) target = $region17
    $region16: #{torch_model_forward.1} parent=1 // pred_region
      %57 = vsyncadd [#allocation7], 0
      %s58 = sshll.u32 %s4, 4
      %s59 = int_to_ptr.hbm [resolvable:$true] %s58
      %s60 = sshll.u32 [#allocation8], 4
      %s61 = int_to_ptr.vmem [resolvable:$true] %s60
      %66 = dma.hbm_to_vmem [thread:$0]  %s59, 512, %s61, [#allocation7], 128, 128, 8
    $region17: #{torch_model_forward.1} parent=1 // pred_fallthru
      _
    // Predicated region
    $region18: #{torch_model_forward.1} parent=1 // pred_check
      _
    $region19: #{torch_model_forward.1} parent=1 // pred_check_branch
      %68 = sbr.rel (0) target = $region21
    $region20: #{torch_model_forward.1} parent=1 // pred_region
      %70 = vsyncadd [#allocation10], 0
      %s71 = sshll.u32 %s5, 4
      %s72 = int_to_ptr.hbm [resolvable:$true] %s71
      %s73 = sshll.u32 [#allocation9], 4
      %s74 = int_to_ptr.vmem [resolvable:$true] %s73
      %79 = dma.hbm_to_vmem [thread:$0]  %s72, 512, %s74, [#allocation10], 128, 128, 8
    $region21: #{torch_model_forward.1} parent=1 // pred_fallthru
      _
    // Predicated region
    $region22: #{torch_model_forward.1} parent=1 // pred_check
      _
    $region23: #{torch_model_forward.1} parent=1 // pred_check_branch
      %81 = sbr.rel (0) target = $region25
    $region24: #{torch_model_forward.1} parent=1 // pred_region
      _
    $region25: #{torch_model_forward.1} parent=1 // pred_fallthru
      _
    // Predicated region
    $region26: #{torch_model_forward.1} parent=1 // pred_check
      _
    $region27: #{torch_model_forward.1} parent=1 // pred_check_branch
      %83 = sbr.rel (0) target = $region29
    $region28: #{torch_model_forward.1} parent=1 // pred_region
      %85 = vsyncadd [#allocation10], 0
      %s86 = sshll.u32 %s7, 4
      %s87 = int_to_ptr.hbm [resolvable:$true] %s86
      %s88 = sshll.u32 [#allocation11], 4
      %s89 = int_to_ptr.vmem [resolvable:$true] %s88
      %94 = dma.hbm_to_vmem [thread:$0]  %s87, 512, %s89, [#allocation10], 128, 128, 8
    $region29: #{torch_model_forward.1} parent=1 // pred_fallthru
      _
    // Predicated region
    $region30: #{torch_model_forward.1} parent=1 // pred_check
      _
    $region31: #{torch_model_forward.1} parent=1 // pred_check_branch
      %96 = sbr.rel (0) target = $region33
    $region32: #{torch_model_forward.1} parent=1 // pred_region
      %98 = vsyncadd [#allocation13], 0
      %s100 = sshll.u32 %s8, 4
      %s101 = int_to_ptr.hbm [resolvable:$true] %s100
      %s102 = sshll.u32 [#allocation12], 4
      %s103 = int_to_ptr.vmem [resolvable:$true] %s102
      %105 = dma.hbm_to_vmem [thread:$0]  %s101, 16, %s103, [#allocation13]
    $region33: #{torch_model_forward.1} parent=1 // pred_fallthru
      _
    // Predicated region
    $region34: #{torch_model_forward.1} parent=1 // pred_check
      _
    $region35: #{torch_model_forward.1} parent=1 // pred_check_branch
      %107 = sbr.rel (0) target = $region37
    $region36: #{torch_model_forward.1} parent=1 // pred_region
      %109 = dma.done [#allocation5], 384
    $region37: #{torch_model_forward.1} parent=1 // pred_fallthru
      _
    // Predicated region
    $region38: #{torch_model_forward.1} parent=1 // pred_check
      _
    $region39: #{torch_model_forward.1} parent=1 // pred_check_branch
      %111 = sbr.rel (0) target = $region41
    $region40: #{torch_model_forward.1} parent=1 // pred_region
      %113 = dma.done [#allocation7], 512
    $region41: #{torch_model_forward.1} parent=1 // pred_fallthru
      _
    // Predicated region
    $region42: #{torch_model_forward.1} parent=1 // pred_check
      _
    $region43: #{torch_model_forward.1} parent=1 // pred_check_branch
      %115 = sbr.rel (0) target = $region45
    $region44: #{torch_model_forward.1} parent=1 // pred_region
      %117 = dma.done [#allocation7], 512
    $region45: #{torch_model_forward.1} parent=1 // pred_fallthru
      _
    // Predicated region
    $region46: #{torch_model_forward.1} parent=1 // pred_check
      _
    $region47: #{torch_model_forward.1} parent=1 // pred_check_branch
      %119 = sbr.rel (0) target = $region49
    $region48: #{torch_model_forward.1} parent=1 // pred_region
      %121 = dma.done [#allocation10], 512
    $region49: #{torch_model_forward.1} parent=1 // pred_fallthru
      _
    // Predicated region
    $region50: #{torch_model_forward.1} parent=1 // pred_check
      _
    $region51: #{torch_model_forward.1} parent=1 // pred_check_branch
      %123 = sbr.rel (0) target = $region53
    $region52: #{torch_model_forward.1} parent=1 // pred_region
      %125 = dma.done [#allocation10], 512
    $region53: #{torch_model_forward.1} parent=1 // pred_fallthru
      _
    // Predicated region
    $region54: #{torch_model_forward.1} parent=1 // pred_check
      _
    $region55: #{torch_model_forward.1} parent=1 // pred_check_branch
      %127 = sbr.rel (0) target = $region57
    $region56: #{torch_model_forward.1} parent=1 // pred_region
      %129 = dma.done [#allocation13], 16
    $region57: #{torch_model_forward.1} parent=1 // pred_fallthru
      _
    %s130 = smul.u32 0, 2
    %v131 = vld [vmem:[#allocation6] sm:$0xff]
    %v132 = vld [vmem:[#allocation6 + $0x8] sm:$0xff]
    %v133 = vld [vmem:[#allocation6 + $0x10] sm:$0xff]
    %v134 = vld [vmem:[#allocation6 + $0x18] sm:$0xff]
    %v135 = vld [vmem:[%s3] sm:$0x1]
    %v137 = vperm.slane %v135, 0
    %s139 = smul.u32 %s130, 128
    %s140 = sld [smem:[#allocation3 + %s139]]
    %s141 = scalar_lea.vmem [#allocation4], %s140
    %v142 = vld [vmem:[%s141] sm:$0x1]
    %s143 = sadd.s32 %s130, 1
    %s144 = smul.u32 %s143, 128
    %s145 = sld [smem:[#allocation3 + %s144]]
    %s146 = scalar_lea.vmem [#allocation4], %s145
    %v147 = vld [vmem:[%s146] sm:$0x1]
    %v149 = vrot.slane %v147, 7
    %vm151 = vcmask 1040384
    %v152 = vsel %vm151, %v142, %v149
    %v153 = vadd.f32 %v152, %v137
    %v154 = vmax.f32 %v153, 0.0
    %s155 = sadd.s32 %s139, 1
    %s156 = sld [smem:[#allocation3 + %s155]]
    %s157 = scalar_lea.vmem [#allocation4], %s156
    %v158 = vld [vmem:[%s157] sm:$0x1]
    %s159 = sadd.s32 %s144, 1
    %s160 = sld [smem:[#allocation3 + %s159]]
    %s161 = scalar_lea.vmem [#allocation4], %s160
    %v162 = vld [vmem:[%s161] sm:$0x1]
    %v164 = vrot.slane %v162, 7
    %v166 = vsel %vm151, %v158, %v164
    %v167 = vadd.f32 %v166, %v137
    %vm168 = vcmask 261120
    %v170 = vsel %vm168, %v154, 0
    %172 = vmatpush.msra.mxu0 0.0
    %173 = vmatpush.msra.mxu0 0.0
    %174 = vmatpush.msra.mxu0 0.0
    %175 = vmatpush.msra.mxu0 0.0
    %176 = vmatpush.msra.mxu0 0.0
    %177 = vmatpush.msra.mxu0 0.0
    %178 = vmatpush.msra.mxu0 0.0
    %179 = vmatpush.msra.mxu0 0.0
    %180 = vmatpush.msra.mxu0 0.0
    %181 = vmatpush.msra.mxu0 0.0
    %182 = vmatpush.msra.mxu0 0.0
    %183 = vmatpush.msra.mxu0 0.0
    %184 = vmatpush.msra.mxu0 %v134
    %185 = vmatpush.msra.mxu0 %v133
    %186 = vmatpush.msra.mxu0 %v132
    %187 = vmatpush.msra.mxu0 %v131
    %188 = vmatmul.f32.gmra.mxu0 %v170
    %v189 = vpop.f32.mrf.mxu0
    %v190 = vadd.f32 0.0, %v189
    %191 = vdwg.mxu0
    %v192 = vadd.f32 %v167, %v190
    %v193 = vmax.f32 %v192, 0.0
    %s194 = sadd.s32 %s139, 2
    %s195 = sld [smem:[#allocation3 + %s194]]
    %s196 = scalar_lea.vmem [#allocation4], %s195
    %v197 = vld [vmem:[%s196] sm:$0x1]
    %s198 = sadd.s32 %s144, 2
    %s199 = sld [smem:[#allocation3 + %s198]]
    %s200 = scalar_lea.vmem [#allocation4], %s199
    %v201 = vld [vmem:[%s200] sm:$0x1]
    %v203 = vrot.slane %v201, 7
    %v205 = vsel %vm151, %v197, %v203
    %v206 = vadd.f32 %v205, %v137
    %v208 = vsel %vm168, %v193, 0
    %210 = vmatpush.msra.mxu0 0.0
    %211 = vmatpush.msra.mxu0 0.0
    %212 = vmatpush.msra.mxu0 0.0
    %213 = vmatpush.msra.mxu0 0.0
    %214 = vmatpush.msra.mxu0 0.0
    %215 = vmatpush.msra.mxu0 0.0
    %216 = vmatpush.msra.mxu0 0.0
    %217 = vmatpush.msra.mxu0 0.0
    %218 = vmatpush.msra.mxu0 0.0
    %219 = vmatpush.msra.mxu0 0.0
    %220 = vmatpush.msra.mxu0 0.0
    %221 = vmatpush.msra.mxu0 0.0
    %222 = vmatpush.msra.mxu0 %v134
    %223 = vmatpush.msra.mxu0 %v133
    %224 = vmatpush.msra.mxu0 %v132
    %225 = vmatpush.msra.mxu0 %v131
    %226 = vmatmul.f32.gmra.mxu0 %v208
    %v227 = vpop.f32.mrf.mxu0
    %v228 = vadd.f32 0.0, %v227
    %229 = vdwg.mxu0
    %v230 = vadd.f32 %v206, %v228
    %v231 = vmax.f32 %v230, 0.0
    %s232 = sadd.s32 %s139, 3
    %s233 = sld [smem:[#allocation3 + %s232]]
    %s234 = scalar_lea.vmem [#allocation4], %s233
    %v235 = vld [vmem:[%s234] sm:$0x1]
    %s236 = sadd.s32 %s144, 3
    %s237 = sld [smem:[#allocation3 + %s236]]
    %s238 = scalar_lea.vmem [#allocation4], %s237
    %v239 = vld [vmem:[%s238] sm:$0x1]
    %v241 = vrot.slane %v239, 7
    %v243 = vsel %vm151, %v235, %v241
    %v244 = vadd.f32 %v243, %v137
    %v246 = vsel %vm168, %v231, 0
    %248 = vmatpush.msra.mxu0 0.0
    %249 = vmatpush.msra.mxu0 0.0
    %250 = vmatpush.msra.mxu0 0.0
    %251 = vmatpush.msra.mxu0 0.0
    %252 = vmatpush.msra.mxu0 0.0
    %253 = vmatpush.msra.mxu0 0.0
    %254 = vmatpush.msra.mxu0 0.0
    %255 = vmatpush.msra.mxu0 0.0
    %256 = vmatpush.msra.mxu0 0.0
    %257 = vmatpush.msra.mxu0 0.0
    %258 = vmatpush.msra.mxu0 0.0
    %259 = vmatpush.msra.mxu0 0.0
    %260 = vmatpush.msra.mxu0 %v134
    %261 = vmatpush.msra.mxu0 %v133
    %262 = vmatpush.msra.mxu0 %v132
    %263 = vmatpush.msra.mxu0 %v131
    %264 = vmatmul.f32.gmra.mxu0 %v246
    %v265 = vpop.f32.mrf.mxu0
    %v266 = vadd.f32 0.0, %v265
    %267 = vdwg.mxu0
    %v268 = vadd.f32 %v244, %v266
    %v269 = vmax.f32 %v268, 0.0
    %s270 = sadd.s32 %s139, 4
    %s271 = sld [smem:[#allocation3 + %s270]]
    %s272 = scalar_lea.vmem [#allocation4], %s271
    %v273 = vld [vmem:[%s272] sm:$0x1]
    %s274 = sadd.s32 %s144, 4
    %s275 = sld [smem:[#allocation3 + %s274]]
    %s276 = scalar_lea.vmem [#allocation4], %s275
    %v277 = vld [vmem:[%s276] sm:$0x1]
    %v279 = vrot.slane %v277, 7
    %v281 = vsel %vm151, %v273, %v279
    %v282 = vadd.f32 %v281, %v137
    %v284 = vsel %vm168, %v269, 0
    %286 = vmatpush.msra.mxu0 0.0
    %287 = vmatpush.msra.mxu0 0.0
    %288 = vmatpush.msra.mxu0 0.0
    %289 = vmatpush.msra.mxu0 0.0
    %290 = vmatpush.msra.mxu0 0.0
    %291 = vmatpush.msra.mxu0 0.0
    %292 = vmatpush.msra.mxu0 0.0
    %293 = vmatpush.msra.mxu0 0.0
    %294 = vmatpush.msra.mxu0 0.0
    %295 = vmatpush.msra.mxu0 0.0
    %296 = vmatpush.msra.mxu0 0.0
    %297 = vmatpush.msra.mxu0 0.0
    %298 = vmatpush.msra.mxu0 %v134
    %299 = vmatpush.msra.mxu0 %v133
    %300 = vmatpush.msra.mxu0 %v132
    %301 = vmatpush.msra.mxu0 %v131
    %302 = vmatmul.f32.gmra.mxu0 %v284
    %v303 = vpop.f32.mrf.mxu0
    %v304 = vadd.f32 0.0, %v303
    %305 = vdwg.mxu0
    %v306 = vadd.f32 %v282, %v304
    %v307 = vmax.f32 %v306, 0.0
    %s308 = sadd.s32 %s139, 5
    %s309 = sld [smem:[#allocation3 + %s308]]
    %s310 = scalar_lea.vmem [#allocation4], %s309
    %v311 = vld [vmem:[%s310] sm:$0x1]
    %s312 = sadd.s32 %s144, 5
    %s313 = sld [smem:[#allocation3 + %s312]]
    %s314 = scalar_lea.vmem [#allocation4], %s313
    %v315 = vld [vmem:[%s314] sm:$0x1]
    %v317 = vrot.slane %v315, 7
    %v319 = vsel %vm151, %v311, %v317
    %v320 = vadd.f32 %v319, %v137
    %v322 = vsel %vm168, %v307, 0
    %324 = vmatpush.msra.mxu0 0.0
    %325 = vmatpush.msra.mxu0 0.0
    %326 = vmatpush.msra.mxu0 0.0
    %327 = vmatpush.msra.mxu0 0.0
    %328 = vmatpush.msra.mxu0 0.0
    %329 = vmatpush.msra.mxu0 0.0
    %330 = vmatpush.msra.mxu0 0.0
    %331 = vmatpush.msra.mxu0 0.0
    %332 = vmatpush.msra.mxu0 0.0
    %333 = vmatpush.msra.mxu0 0.0
    %334 = vmatpush.msra.mxu0 0.0
    %335 = vmatpush.msra.mxu0 0.0
    %336 = vmatpush.msra.mxu0 %v134
    %337 = vmatpush.msra.mxu0 %v133
    %338 = vmatpush.msra.mxu0 %v132
    %339 = vmatpush.msra.mxu0 %v131
    %340 = vmatmul.f32.gmra.mxu0 %v322
    %v341 = vpop.f32.mrf.mxu0
    %v342 = vadd.f32 0.0, %v341
    %343 = vdwg.mxu0
    %v344 = vadd.f32 %v320, %v342
    %v345 = vmax.f32 %v344, 0.0
    %s346 = sadd.s32 %s139, 6
    %s347 = sld [smem:[#allocation3 + %s346]]
    %s348 = scalar_lea.vmem [#allocation4], %s347
    %v349 = vld [vmem:[%s348] sm:$0x1]
    %s350 = sadd.s32 %s144, 6
    %s351 = sld [smem:[#allocation3 + %s350]]
    %s352 = scalar_lea.vmem [#allocation4], %s351
    %v353 = vld [vmem:[%s352] sm:$0x1]
    %v355 = vrot.slane %v353, 7
    %v357 = vsel %vm151, %v349, %v355
    %v358 = vadd.f32 %v357, %v137
    %v360 = vsel %vm168, %v345, 0
    %362 = vmatpush.msra.mxu0 0.0
    %363 = vmatpush.msra.mxu0 0.0
    %364 = vmatpush.msra.mxu0 0.0
    %365 = vmatpush.msra.mxu0 0.0
    %366 = vmatpush.msra.mxu0 0.0
    %367 = vmatpush.msra.mxu0 0.0
    %368 = vmatpush.msra.mxu0 0.0
    %369 = vmatpush.msra.mxu0 0.0
    %370 = vmatpush.msra.mxu0 0.0
    %371 = vmatpush.msra.mxu0 0.0
    %372 = vmatpush.msra.mxu0 0.0
    %373 = vmatpush.msra.mxu0 0.0
    %374 = vmatpush.msra.mxu0 %v134
    %375 = vmatpush.msra.mxu0 %v133
    %376 = vmatpush.msra.mxu0 %v132
    %377 = vmatpush.msra.mxu0 %v131
    %378 = vmatmul.f32.gmra.mxu0 %v360
    %v379 = vpop.f32.mrf.mxu0
    %v380 = vadd.f32 0.0, %v379
    %381 = vdwg.mxu0
    %v382 = vadd.f32 %v358, %v380
    %v383 = vmax.f32 %v382, 0.0
    %s384 = sadd.s32 %s139, 7
    %s385 = sld [smem:[#allocation3 + %s384]]
    %s386 = scalar_lea.vmem [#allocation4], %s385
    %v387 = vld [vmem:[%s386] sm:$0x1]
    %s388 = sadd.s32 %s144, 7
    %s389 = sld [smem:[#allocation3 + %s388]]
    %s390 = scalar_lea.vmem [#allocation4], %s389
    %v391 = vld [vmem:[%s390] sm:$0x1]
    %v393 = vrot.slane %v391, 7
    %v395 = vsel %vm151, %v387, %v393
    %v396 = vadd.f32 %v395, %v137
    %v398 = vsel %vm168, %v383, 0
    %400 = vmatpush.msra.mxu0 0.0
    %401 = vmatpush.msra.mxu0 0.0
    %402 = vmatpush.msra.mxu0 0.0
    %403 = vmatpush.msra.mxu0 0.0
    %404 = vmatpush.msra.mxu0 0.0
    %405 = vmatpush.msra.mxu0 0.0
    %406 = vmatpush.msra.mxu0 0.0
    %407 = vmatpush.msra.mxu0 0.0
    %408 = vmatpush.msra.mxu0 0.0
    %409 = vmatpush.msra.mxu0 0.0
    %410 = vmatpush.msra.mxu0 0.0
    %411 = vmatpush.msra.mxu0 0.0
    %412 = vmatpush.msra.mxu0 %v134
    %413 = vmatpush.msra.mxu0 %v133
    %414 = vmatpush.msra.mxu0 %v132
    %415 = vmatpush.msra.mxu0 %v131
    %416 = vmatmul.f32.gmra.mxu0 %v398
    %v417 = vpop.f32.mrf.mxu0
    %v418 = vadd.f32 0.0, %v417
    %419 = vdwg.mxu0
    %v420 = vadd.f32 %v396, %v418
    %v421 = vmax.f32 %v420, 0.0
    %v422 = vrot.slane %v193, 6
    %v424 = vrot.slane %v231, 4
    %v426 = vrot.slane %v269, 2
    %v428 = vrot.slane %v345, 6
    %v430 = vrot.slane %v383, 4
    %v433 = vrot.slane %v421, 2
    %vm435 = vcmask 1041408
    %v436 = vsel %vm435, %v154, %v422
    %vm437 = vcmask 1043456
    %v438 = vsel %vm437, %v436, %v424
    %vm439 = vcmask 1045504
    %v440 = vsel %vm439, %v438, %v426
    %v441 = vsel %vm435, %v307, %v428
    %v442 = vsel %vm437, %v441, %v430
    %v443 = vsel %vm439, %v442, %v433
    %v444 = vld [vmem:[#allocation8] sm:$0xff]
    %v445 = vld [vmem:[#allocation8 + $0x8] sm:$0xff]
    %v446 = vld [vmem:[#allocation8 + $0x10] sm:$0xff]
    %v447 = vld [vmem:[#allocation8 + $0x18] sm:$0xff]
    %v448 = vld [vmem:[#allocation9] sm:$0xff]
    %v449 = vld [vmem:[#allocation9 + $0x8] sm:$0xff]
    %v450 = vld [vmem:[#allocation9 + $0x10] sm:$0xff]
    %v451 = vld [vmem:[#allocation9 + $0x18] sm:$0xff]
    %v452 = vld [vmem:[%s6] sm:$0x1]
    %v454 = vperm.slane %v452, 0
    %v457 = vsel %vm168, %v440, 0
    %v460 = vsel %vm168, %v443, 0
    %462 = vmatpush.msra.mxu0 0.0
    %463 = vmatpush.msra.mxu0 0.0
    %464 = vmatpush.msra.mxu0 0.0
    %465 = vmatpush.msra.mxu0 0.0
    %466 = vmatpush.msra.mxu0 0.0
    %467 = vmatpush.msra.mxu0 0.0
    %468 = vmatpush.msra.mxu0 0.0
    %469 = vmatpush.msra.mxu0 0.0
    %470 = vmatpush.msra.mxu0 0.0
    %471 = vmatpush.msra.mxu0 0.0
    %472 = vmatpush.msra.mxu0 0.0
    %473 = vmatpush.msra.mxu0 0.0
    %474 = vmatpush.msra.mxu0 %v447
    %475 = vmatpush.msra.mxu0 %v446
    %476 = vmatpush.msra.mxu0 %v445
    %477 = vmatpush.msra.mxu0 %v444
    %478 = vmatmul.f32.gmra.mxu0 %v457
    %v479 = vpop.f32.mrf.mxu0
    %v480 = vadd.f32 %v454, %v479
    %481 = vmatmul.f32.gmra.mxu0 %v460
    %v482 = vpop.f32.mrf.mxu0
    %v483 = vadd.f32 %v454, %v482
    %484 = vdwg.mxu0
    %v485 = vmax.f32 %v480, 0.0
    %v487 = vsel %vm168, %v485, 0
    %489 = vmatpush.msra.mxu0 0.0
    %490 = vmatpush.msra.mxu0 0.0
    %491 = vmatpush.msra.mxu0 0.0
    %492 = vmatpush.msra.mxu0 0.0
    %493 = vmatpush.msra.mxu0 0.0
    %494 = vmatpush.msra.mxu0 0.0
    %495 = vmatpush.msra.mxu0 0.0
    %496 = vmatpush.msra.mxu0 0.0
    %497 = vmatpush.msra.mxu0 0.0
    %498 = vmatpush.msra.mxu0 0.0
    %499 = vmatpush.msra.mxu0 0.0
    %500 = vmatpush.msra.mxu0 0.0
    %501 = vmatpush.msra.mxu0 %v451
    %502 = vmatpush.msra.mxu0 %v450
    %503 = vmatpush.msra.mxu0 %v449
    %504 = vmatpush.msra.mxu0 %v448
    %505 = vmatmul.f32.gmra.mxu0 %v487
    %v506 = vpop.f32.mrf.mxu0
    %v507 = vadd.f32 0.0, %v506
    %508 = vdwg.mxu0
    %v510 = vrot.slane %v507, 6
    %v512 = vadd.f32 %v480, %v510
    %v513 = vmax.f32 %v512, 0.0
    %v515 = vrot.slane %v513, 2
    %v516 = vsel %vm168, %v515, 0
    %518 = vmatpush.msra.mxu0 0.0
    %519 = vmatpush.msra.mxu0 0.0
    %520 = vmatpush.msra.mxu0 0.0
    %521 = vmatpush.msra.mxu0 0.0
    %522 = vmatpush.msra.mxu0 0.0
    %523 = vmatpush.msra.mxu0 0.0
    %524 = vmatpush.msra.mxu0 0.0
    %525 = vmatpush.msra.mxu0 0.0
    %526 = vmatpush.msra.mxu0 0.0
    %527 = vmatpush.msra.mxu0 0.0
    %528 = vmatpush.msra.mxu0 0.0
    %529 = vmatpush.msra.mxu0 0.0
    %530 = vmatpush.msra.mxu0 %v451
    %531 = vmatpush.msra.mxu0 %v450
    %532 = vmatpush.msra.mxu0 %v449
    %533 = vmatpush.msra.mxu0 %v448
    %534 = vmatmul.f32.gmra.mxu0 %v516
    %v535 = vpop.f32.mrf.mxu0
    %v536 = vadd.f32 0.0, %v535
    %537 = vdwg.mxu0
    %v539 = vrot.slane %v536, 4
    %v541 = vadd.f32 %v480, %v539
    %v542 = vmax.f32 %v541, 0.0
    %v544 = vrot.slane %v542, 4
    %v545 = vsel %vm168, %v544, 0
    %547 = vmatpush.msra.mxu0 0.0
    %548 = vmatpush.msra.mxu0 0.0
    %549 = vmatpush.msra.mxu0 0.0
    %550 = vmatpush.msra.mxu0 0.0
    %551 = vmatpush.msra.mxu0 0.0
    %552 = vmatpush.msra.mxu0 0.0
    %553 = vmatpush.msra.mxu0 0.0
    %554 = vmatpush.msra.mxu0 0.0
    %555 = vmatpush.msra.mxu0 0.0
    %556 = vmatpush.msra.mxu0 0.0
    %557 = vmatpush.msra.mxu0 0.0
    %558 = vmatpush.msra.mxu0 0.0
    %559 = vmatpush.msra.mxu0 %v451
    %560 = vmatpush.msra.mxu0 %v450
    %561 = vmatpush.msra.mxu0 %v449
    %562 = vmatpush.msra.mxu0 %v448
    %563 = vmatmul.f32.gmra.mxu0 %v545
    %v564 = vpop.f32.mrf.mxu0
    %v565 = vadd.f32 0.0, %v564
    %566 = vdwg.mxu0
    %v568 = vrot.slane %v565, 2
    %v570 = vadd.f32 %v480, %v568
    %v571 = vmax.f32 %v570, 0.0
    %v573 = vrot.slane %v571, 6
    %v574 = vsel %vm168, %v573, 0
    %576 = vmatpush.msra.mxu0 0.0
    %577 = vmatpush.msra.mxu0 0.0
    %578 = vmatpush.msra.mxu0 0.0
    %579 = vmatpush.msra.mxu0 0.0
    %580 = vmatpush.msra.mxu0 0.0
    %581 = vmatpush.msra.mxu0 0.0
    %582 = vmatpush.msra.mxu0 0.0
    %583 = vmatpush.msra.mxu0 0.0
    %584 = vmatpush.msra.mxu0 0.0
    %585 = vmatpush.msra.mxu0 0.0
    %586 = vmatpush.msra.mxu0 0.0
    %587 = vmatpush.msra.mxu0 0.0
    %588 = vmatpush.msra.mxu0 %v451
    %589 = vmatpush.msra.mxu0 %v450
    %590 = vmatpush.msra.mxu0 %v449
    %591 = vmatpush.msra.mxu0 %v448
    %592 = vmatmul.f32.gmra.mxu0 %v574
    %v593 = vpop.f32.mrf.mxu0
    %v594 = vadd.f32 0.0, %v593
    %595 = vdwg.mxu0
    %v596 = vadd.f32 %v483, %v594
    %v597 = vmax.f32 %v596, 0.0
    %v599 = vsel %vm168, %v597, 0
    %601 = vmatpush.msra.mxu0 0.0
    %602 = vmatpush.msra.mxu0 0.0
    %603 = vmatpush.msra.mxu0 0.0
    %604 = vmatpush.msra.mxu0 0.0
    %605 = vmatpush.msra.mxu0 0.0
    %606 = vmatpush.msra.mxu0 0.0
    %607 = vmatpush.msra.mxu0 0.0
    %608 = vmatpush.msra.mxu0 0.0
    %609 = vmatpush.msra.mxu0 0.0
    %610 = vmatpush.msra.mxu0 0.0
    %611 = vmatpush.msra.mxu0 0.0
    %612 = vmatpush.msra.mxu0 0.0
    %613 = vmatpush.msra.mxu0 %v451
    %614 = vmatpush.msra.mxu0 %v450
    %615 = vmatpush.msra.mxu0 %v449
    %616 = vmatpush.msra.mxu0 %v448
    %617 = vmatmul.f32.gmra.mxu0 %v599
    %v618 = vpop.f32.mrf.mxu0
    %v619 = vadd.f32 0.0, %v618
    %620 = vdwg.mxu0
    %v622 = vrot.slane %v619, 6
    %v624 = vadd.f32 %v483, %v622
    %v625 = vmax.f32 %v624, 0.0
    %v627 = vrot.slane %v625, 2
    %v628 = vsel %vm168, %v627, 0
    %630 = vmatpush.msra.mxu0 0.0
    %631 = vmatpush.msra.mxu0 0.0
    %632 = vmatpush.msra.mxu0 0.0
    %633 = vmatpush.msra.mxu0 0.0
    %634 = vmatpush.msra.mxu0 0.0
    %635 = vmatpush.msra.mxu0 0.0
    %636 = vmatpush.msra.mxu0 0.0
    %637 = vmatpush.msra.mxu0 0.0
    %638 = vmatpush.msra.mxu0 0.0
    %639 = vmatpush.msra.mxu0 0.0
    %640 = vmatpush.msra.mxu0 0.0
    %641 = vmatpush.msra.mxu0 0.0
    %642 = vmatpush.msra.mxu0 %v451
    %643 = vmatpush.msra.mxu0 %v450
    %644 = vmatpush.msra.mxu0 %v449
    %645 = vmatpush.msra.mxu0 %v448
    %646 = vmatmul.f32.gmra.mxu0 %v628
    %v647 = vpop.f32.mrf.mxu0
    %v648 = vadd.f32 0.0, %v647
    %649 = vdwg.mxu0
    %v651 = vrot.slane %v648, 4
    %v653 = vadd.f32 %v483, %v651
    %v654 = vmax.f32 %v653, 0.0
    %v656 = vrot.slane %v654, 4
    %v657 = vsel %vm168, %v656, 0
    %659 = vmatpush.msra.mxu0 0.0
    %660 = vmatpush.msra.mxu0 0.0
    %661 = vmatpush.msra.mxu0 0.0
    %662 = vmatpush.msra.mxu0 0.0
    %663 = vmatpush.msra.mxu0 0.0
    %664 = vmatpush.msra.mxu0 0.0
    %665 = vmatpush.msra.mxu0 0.0
    %666 = vmatpush.msra.mxu0 0.0
    %667 = vmatpush.msra.mxu0 0.0
    %668 = vmatpush.msra.mxu0 0.0
    %669 = vmatpush.msra.mxu0 0.0
    %670 = vmatpush.msra.mxu0 0.0
    %671 = vmatpush.msra.mxu0 %v451
    %672 = vmatpush.msra.mxu0 %v450
    %673 = vmatpush.msra.mxu0 %v449
    %674 = vmatpush.msra.mxu0 %v448
    %675 = vmatmul.f32.gmra.mxu0 %v657
    %v676 = vpop.f32.mrf.mxu0
    %v677 = vadd.f32 0.0, %v676
    %678 = vdwg.mxu0
    %v680 = vrot.slane %v677, 2
    %v682 = vadd.f32 %v483, %v680
    %v683 = vmax.f32 %v682, 0.0
    %v684 = vsel %vm435, %v485, %v513
    %v685 = vsel %vm437, %v684, %v542
    %v686 = vsel %vm439, %v685, %v571
    %v687 = vsel %vm435, %v597, %v625
    %v688 = vsel %vm437, %v687, %v654
    %v689 = vsel %vm439, %v688, %v683
    %v690 = vld [vmem:[#allocation11] sm:$0xff]
    %v691 = vld [vmem:[#allocation11 + $0x8] sm:$0xff]
    %v692 = vld [vmem:[#allocation11 + $0x10] sm:$0xff]
    %v693 = vld [vmem:[#allocation11 + $0x18] sm:$0xff]
    %v694 = vld [vmem:[#allocation12] sm:$0x1]
    %v696 = vperm.slane %v694, 0
    %v699 = vsel %vm168, %v686, 0
    %v702 = vsel %vm168, %v689, 0
    %704 = vmatpush.msra.mxu0 0.0
    %705 = vmatpush.msra.mxu0 0.0
    %706 = vmatpush.msra.mxu0 0.0
    %707 = vmatpush.msra.mxu0 0.0
    %708 = vmatpush.msra.mxu0 0.0
    %709 = vmatpush.msra.mxu0 0.0
    %710 = vmatpush.msra.mxu0 0.0
    %711 = vmatpush.msra.mxu0 0.0
    %712 = vmatpush.msra.mxu0 0.0
    %713 = vmatpush.msra.mxu0 0.0
    %714 = vmatpush.msra.mxu0 0.0
    %715 = vmatpush.msra.mxu0 0.0
    %716 = vmatpush.msra.mxu0 %v693
    %717 = vmatpush.msra.mxu0 %v692
    %718 = vmatpush.msra.mxu0 %v691
    %719 = vmatpush.msra.mxu0 %v690
    %720 = vmatmul.f32.gmra.mxu0 %v699
    %v721 = vpop.f32.mrf.mxu0
    %v722 = vadd.f32 %v696, %v721
    %723 = vmatmul.f32.gmra.mxu0 %v702
    %v724 = vpop.f32.mrf.mxu0
    %v725 = vadd.f32 %v696, %v724
    %726 = vdwg.mxu0
    %727 = vst [vmem:[%s9] sm:$0xff] %v722
    %728 = vst [vmem:[%s9 + $0x8] sm:$0xff] %v725
    // Predicated region
    $region58: #{torch_model_forward.1} parent=1 // pred_check
      _
    $region59: #{torch_model_forward.1} parent=1 // pred_check_branch
      %730 = sbr.rel (0) target = $region61
    $region60: #{torch_model_forward.1} parent=1 // pred_region
      _
    $region61: #{torch_model_forward.1} parent=1 // pred_fallthru
      _
    // Predicated region
    $region62: #{torch_model_forward.1} parent=1 // pred_check
      _
    $region63: #{torch_model_forward.1} parent=1 // pred_check_branch
      %732 = sbr.rel (0) target = $region65
    $region64: #{torch_model_forward.1} parent=1 // pred_region
      _
    $region65: #{torch_model_forward.1} parent=1 // pred_fallthru
      _
    %733 = vsyncpa [#allocation5], 1
    %734 = vsyncpa [#allocation7], 1
    %735 = vsyncpa [#allocation10], 1
    %736 = vsyncpa [#allocation13], 1

</llo_original>
